<compile_context>
chip_gen: v5e
topology: v5e:2x2
jax: 0.10.0
libtpu: 0.0.40
codegen_flags: <defaults>
</compile_context>

<pallas_src>
import math

import jax
import jax.numpy as jnp
from jax.experimental import pallas as pl
from jax.experimental.pallas import tpu as pltpu


_PALLAS_MIN_ROWS = 2048   # below this, kernel fixed cost dominates -> jnp.dot
_MAX_ROW_TILE = 8192


# ----------------------------- kernels --------------------------------------


def _fused_mlp_kernel(x_ref, w1_ref, b1_ref, w2_ref, b2_ref, o_ref):
    # x:(TR,IN)  w1:(IN,H1)  b1:(1,H1)  w2:(H1,OUT)  b2:(1,OUT)  o:(TR,OUT)
    h = jnp.dot(x_ref[...], w1_ref[...], preferred_element_type=jnp.float32)
    h = jnp.maximum(h + b1_ref[...].astype(jnp.float32), 0.0)          # ReLU
    if w2_ref.dtype != jnp.float32:
        h = h.astype(w2_ref.dtype)    # keep native (bf16) MXU operands
    y = jnp.dot(h, w2_ref[...], preferred_element_type=jnp.float32)
    o_ref[...] = (y + b2_ref[...].astype(jnp.float32)).astype(o_ref.dtype)


def _linear_kernel(x_ref, w_ref, b_ref, o_ref):
    # class_pred path: a single Linear, no activation.
    y = jnp.dot(x_ref[...], w_ref[...], preferred_element_type=jnp.float32)
    o_ref[...] = (y + b_ref[...].astype(jnp.float32)).astype(o_ref.dtype)


# ------------------------- tiling / VMEM helpers -----------------------------


def _vmem_budgets():
    """Generation-aware (tile_budget_bytes, vmem_limit_cap_bytes)."""
    try:
        cap = int(pltpu.get_tpu_info().vmem_capacity_bytes)
    except Exception:                 # conservative fallback (v7x: 64 MiB / TC)
        cap = 64 << 20
    if cap >= (100 << 20):            # v5e / v6e: 128 MiB physical VMEM
        return 96 << 20, 112 << 20
    return 40 << 20, 48 << 20         # v7x


def _pick_row_tile(rows, per_row_bytes, resident_bytes, budget):
    """Largest multiple-of-8 row tile that fits the VMEM budget, capped at
    _MAX_ROW_TILE, with a >=2-step grid guard for v7x's two TensorCores."""
    rows8 = ((rows + 7) // 8) * 8
    tr = (budget - resident_bytes) // max(per_row_bytes, 1)
    tr = max(8, min(_MAX_ROW_TILE, (tr // 8) * 8))
    half = ((pl.cdiv(rows, 2) + 7) // 8) * 8
    if half >= 512:                   # only split when each half is still big
        tr = min(tr, half)
    return min(tr, rows8)


# ----------------------------- pallas wrappers -------------------------------


def _fused_mlp_pallas(x2, w1, b1, w2, b2):
    R, IN = x2.shape
    H1 = w1.shape[1]
    OUT = w2.shape[1]
    itemsize = jnp.dtype(x2.dtype).itemsize
    w_itemsize = jnp.dtype(w1.dtype).itemsize

    budget, limit_cap = _vmem_budgets()
    # Per-row: double-buffered x/out blocks + in-kernel f32 intermediates h, y.
    per_row = 2 * (IN + OUT) * itemsize + (H1 + OUT) * 4
    # Resident constants (counted double-buffered, conservative).
    resident = 2 * (IN * H1 + H1 * OUT + H1 + OUT) * w_itemsize
    tr = _pick_row_tile(R, per_row, resident, budget)
    grid = (pl.cdiv(R, tr),)

    vmem_needed = tr * per_row + resident
    vmem_limit = int(min(max(vmem_needed + (4 << 20), 16 << 20), limit_cap))

    cost = pl.CostEstimate(
        flops=2 * R * (IN * H1 + H1 * OUT),
        transcendentals=0,
        bytes_accessed=(R * (IN + OUT) * itemsize
                        + (IN * H1 + H1 * OUT + H1 + OUT) * w_itemsize),
    )

    return pl.pallas_call(
        _fused_mlp_kernel,
        out_shape=jax.ShapeDtypeStruct((R, OUT), x2.dtype),
        grid_spec=pltpu.PrefetchScalarGridSpec(
            num_scalar_prefetch=0,
            grid=grid,
            in_specs=[
                pl.BlockSpec((tr, IN), lambda i: (i, 0)),
                # Constant index_map: weights/biases stay resident across steps.
                pl.BlockSpec((IN, H1), lambda i: (0, 0)),
                pl.BlockSpec((1, H1), lambda i: (0, 0)),
                pl.BlockSpec((H1, OUT), lambda i: (0, 0)),
                pl.BlockSpec((1, OUT), lambda i: (0, 0)),
            ],
            out_specs=pl.BlockSpec((tr, OUT), lambda i: (i, 0)),
        ),
        compiler_params=pltpu.CompilerParams(
            dimension_semantics=("parallel",),
            vmem_limit_bytes=vmem_limit,
        ),
        cost_estimate=cost,
    )(x2, w1, b1.reshape(1, H1), w2, b2.reshape(1, OUT))


def _linear_pallas(x2, w, b):
    R, IN = x2.shape
    OUT = w.shape[1]
    itemsize = jnp.dtype(x2.dtype).itemsize
    w_itemsize = jnp.dtype(w.dtype).itemsize

    budget, limit_cap = _vmem_budgets()
    per_row = 2 * (IN + OUT) * itemsize + OUT * 4          # f32 intermediate y
    resident = 2 * (IN * OUT + OUT) * w_itemsize
    tr = _pick_row_tile(R, per_row, resident, budget)
    grid = (pl.cdiv(R, tr),)

    vmem_needed = tr * per_row + resident
    vmem_limit = int(min(max(vmem_needed + (4 << 20), 16 << 20), limit_cap))

    cost = pl.CostEstimate(
        flops=2 * R * IN * OUT,
        transcendentals=0,
        bytes_accessed=(R * (IN + OUT) * itemsize + (IN * OUT + OUT) * w_itemsize),
    )

    return pl.pallas_call(
        _linear_kernel,
        out_shape=jax.ShapeDtypeStruct((R, OUT), x2.dtype),
        grid_spec=pltpu.PrefetchScalarGridSpec(
            num_scalar_prefetch=0,
            grid=grid,
            in_specs=[
                pl.BlockSpec((tr, IN), lambda i: (i, 0)),
                pl.BlockSpec((IN, OUT), lambda i: (0, 0)),
                pl.BlockSpec((1, OUT), lambda i: (0, 0)),
            ],
            out_specs=pl.BlockSpec((tr, OUT), lambda i: (i, 0)),
        ),
        compiler_params=pltpu.CompilerParams(
            dimension_semantics=("parallel",),
            vmem_limit_bytes=vmem_limit,
        ),
        cost_estimate=cost,
    )(x2, w, b.reshape(1, OUT))


# --------------------------- small-problem fast paths -------------------------


def _mlp_jnp(x2, w1, b1, w2, b2):
    h = jnp.maximum(jnp.dot(x2, w1, preferred_element_type=jnp.float32)
                    + b1.astype(jnp.float32), 0.0)
    if w2.dtype != jnp.float32:
        h = h.astype(w2.dtype)
    y = jnp.dot(h, w2, preferred_element_type=jnp.float32) + b2.astype(jnp.float32)
    return y.astype(x2.dtype)


def _linear_jnp(x2, w, b):
    y = jnp.dot(x2, w, preferred_element_type=jnp.float32) + b.astype(jnp.float32)
    return y.astype(x2.dtype)


# ------------------------------- module forward ------------------------------


def mlp_decoder_forward(x, params, out_shape, max_shape=(1, 1, 1, 1),
                        class_pred=False, force_pallas=False, compute_dtype=None):
    """Forward pass of MLPDecoder.

    params = (w1, b1, w2, b2), weights stored as (in, out) so y = x @ W + b
    (equivalent to torch's x @ W.T + b).  compute_dtype=jnp.bfloat16 optionally
    casts x / W1 / W2 to bf16 (native MXU operands, halves HBM traffic) while
    keeping bias-add / ReLU in f32.
    """
    if isinstance(x, tuple):
        x = x[0]
    w1, b1, w2, b2 = params
    if compute_dtype is not None:
        x = x.astype(compute_dtype)
        w1 = w1.astype(compute_dtype)
        w2 = w2.astype(compute_dtype)

    in_f = w1.shape[0]
    lead_shape = x.shape[:-1]
    x2 = x.reshape(-1, in_f)
    R = x2.shape[0]

    if class_pred:
        # First Linear only.  OUT = hid[0] (< 128 lanes here), so plain XLA is
        # at least as good; the Pallas linear kernel is used when forced.
        y = _linear_pallas(x2, w1, b1) if force_pallas else _linear_jnp(x2, w1, b1)
        return y.reshape(*lead_shape, w1.shape[1])

    assert len(out_shape) == 4, "MLPDecoder crop semantics assume a 4-D out_shape"
    o0, o1, oh, ow = out_shape
    # Fold the spatial crop into a static selection of W2 columns / b2 entries.
    if sum(max_shape[2:]) > 0:
        kh, kw = min(int(max_shape[2]), oh), min(int(max_shape[3]), ow)
    else:
        kh, kw = oh, ow
    if (kh, kw) != (oh, ow):
        h1 = w1.shape[1]
        w2_eff = w2.reshape(h1, o0, o1, oh, ow)[:, :, :, :kh, :kw].reshape(h1, -1)
        b2_eff = b2.reshape(o0, o1, oh, ow)[:, :, :kh, :kw].reshape(-1)
    else:
        w2_eff, b2_eff = w2, b2

    use_pallas = force_pallas or R >= _PALLAS_MIN_ROWS
    if use_pallas:
        y = _fused_mlp_pallas(x2, w1, b1, w2_eff, b2_eff)
    else:
        y = _mlp_jnp(x2, w1, b1, w2_eff, b2_eff)
    return y.reshape(-1, o0, o1, kh, kw)


# ------------------------------------ demo -----------------------------------

if __name__ == "__main__":
    # MLPDecoder(in_features=32, hid=(64,), out_shape=(4,4,5,5)): MLP 32->64->400.
    in_features, hid = 32, 64
    out_shape = (4, 4, 5, 5)
    max_shape = (1, 1, 3, 3)            # crop 5x5 -> 3x3 (folded into W2/b2)
    out_features = math.prod(out_shape)

    key = jax.random.PRNGKey(0)
    kxs, kxb, k1, k2, k3, k4 = jax.random.split(key, 6)

    w1 = 0.1 * jax.random.normal(k1, (in_features, hid), dtype=jnp.float32)
    b1 = 0.1 * jax.random.normal(k2, (hid,), dtype=jnp.float32)
    w2 = 0.1 * jax.random.normal(k3, (hid, out_features), dtype=jnp.float32)
    b2 = 0.1 * jax.random.normal(k4, (out_features,), dtype=jnp.float32)
    params = (w1, b1, w2, b2)

    def ref_decode(x, crop=True):
        y = jnp.maximum(x @ w1 + b1, 0.0) @ w2 + b2
        y = y.reshape(-1, *out_shape)
        return y[:, :, :, :max_shape[2], :max_shape[3]] if crop else y

    tol = 5e-3   # covers default-precision matmul noise in the XLA fast path

    # (a) small batch -> jnp fast path.
    x_small = jax.random.normal(kxs, (8, in_features), dtype=jnp.float32)
    out_a = jax.block_until_ready(
        mlp_decoder_forward(x_small, params, out_shape, max_shape=max_shape))
    assert out_a.shape == (8, 4, 4, 3, 3)
    assert jnp.max(jnp.abs(out_a - ref_decode(x_small))) < tol

    # (b) same inputs forced through the fused Pallas kernel (tiny R, crop folded).
    out_b = jax.block_until_ready(
        mlp_decoder_forward(x_small, params, out_shape, max_shape=max_shape,
                            force_pallas=True))
    assert out_b.shape == (8, 4, 4, 3, 3)
    assert jnp.max(jnp.abs(out_b - ref_decode(x_small))) < tol

    # (c) larger batch -> Pallas path with a >=2-step "parallel" grid (v7x
    #     megacore) and a masked partial last row-block.
    x_big = jax.random.normal(kxb, (4100, in_features), dtype=jnp.float32)
    out_c = jax.block_until_ready(
        mlp_decoder_forward(x_big, params, out_shape, max_shape=max_shape))
    assert out_c.shape == (4100, 4, 4, 3, 3)
    assert jnp.max(jnp.abs(out_c - ref_decode(x_big))) < tol

    # (d) no-crop path (sum(max_shape[2:]) == 0 keeps the full out_shape).
    out_d = jax.block_until_ready(
        mlp_decoder_forward(x_small, params, out_shape, max_shape=(0, 0, 0, 0),
                            force_pallas=True))
    assert out_d.shape == (8, 4, 4, 5, 5)
    assert jnp.max(jnp.abs(out_d - ref_decode(x_small, crop=False))) < tol

    # (e) class_pred path: jnp by default, Pallas linear kernel when forced.
    ref_cls = x_small @ w1 + b1
    out_e = jax.block_until_ready(
        mlp_decoder_forward(x_small, params, out_shape, class_pred=True))
    out_f = jax.block_until_ready(
        mlp_decoder_forward(x_small, params, out_shape, class_pred=True,
                            force_pallas=True))
    assert jnp.max(jnp.abs(out_e - ref_cls)) < tol
    assert jnp.max(jnp.abs(out_f - ref_cls)) < tol

    print("KERNEL_OK")
</pallas_src>

<mosaic_0001>
module attributes {stable_mosaic.version = 11 : i64} {
  func.func @_fused_mlp_kernel(%arg0: i32, %arg1: memref<8x32xf32, #tpu.memory_space<vmem>>, %arg2: memref<32x64xf32, #tpu.memory_space<vmem>>, %arg3: memref<1x64xf32, #tpu.memory_space<vmem>>, %arg4: memref<64x144xf32, #tpu.memory_space<vmem>>, %arg5: memref<1x144xf32, #tpu.memory_space<vmem>>, %arg6: memref<8x144xf32, #tpu.memory_space<vmem>>) attributes {dimension_semantics = [#tpu.dimension_semantics<parallel>], iteration_bounds = array<i64: 1>, scalar_prefetch = 0 : i64, scratch_operands = 0 : i64, tpu.core_type = #tpu.core_type<tc>, window_params = [{transform_indices = @transform_0, window_bounds = array<i64: 8, 32>}, {pipeline_mode = #tpu.pipeline_mode<synchronous>, transform_indices = @transform_1, window_bounds = array<i64: 32, 64>}, {pipeline_mode = #tpu.pipeline_mode<synchronous>, transform_indices = @transform_2, window_bounds = array<i64: 1, 64>}, {pipeline_mode = #tpu.pipeline_mode<synchronous>, transform_indices = @transform_3, window_bounds = array<i64: 64, 144>}, {pipeline_mode = #tpu.pipeline_mode<synchronous>, transform_indices = @transform_4, window_bounds = array<i64: 1, 144>}, {transform_indices = @transform_5, window_bounds = array<i64: 8, 144>}]} {
    %c0 = arith.constant 0 : index
    %c0_0 = arith.constant 0 : index
    %0 = vector.load %arg1[%c0, %c0_0] : memref<8x32xf32, #tpu.memory_space<vmem>>, vector<8x32xf32>
    %c0_1 = arith.constant 0 : index
    %c0_2 = arith.constant 0 : index
    %1 = vector.load %arg2[%c0_1, %c0_2] : memref<32x64xf32, #tpu.memory_space<vmem>>, vector<32x64xf32>
    %cst = arith.constant dense<0.000000e+00> : vector<8x64xf32>
    %2 = tpu.matmul %0, %1, %cst {dimension_numbers = #tpu.dot_dimension_numbers<[1], [0], [0], [1], [0, 0, 1, 1], [], []>} : vector<8x32xf32>, vector<32x64xf32>, vector<8x64xf32> -> vector<8x64xf32>
    %c0_3 = arith.constant 0 : index
    %c0_4 = arith.constant 0 : index
    %3 = vector.load %arg3[%c0_3, %c0_4] : memref<1x64xf32, #tpu.memory_space<vmem>>, vector<1x64xf32>
    %4 = vector.broadcast %3 : vector<1x64xf32> to vector<8x64xf32>
    %5 = arith.addf %2, %4 : vector<8x64xf32>
    %cst_5 = arith.constant 0.000000e+00 : f32
    %6 = vector.broadcast %cst_5 : f32 to vector<8x64xf32>
    %7 = arith.maximumf %5, %6 : vector<8x64xf32>
    %c0_6 = arith.constant 0 : index
    %c0_7 = arith.constant 0 : index
    %8 = vector.load %arg4[%c0_6, %c0_7] : memref<64x144xf32, #tpu.memory_space<vmem>>, vector<64x144xf32>
    %cst_8 = arith.constant dense<0.000000e+00> : vector<8x144xf32>
    %9 = tpu.matmul %7, %8, %cst_8 {dimension_numbers = #tpu.dot_dimension_numbers<[1], [0], [0], [1], [0, 0, 1, 1], [], []>} : vector<8x64xf32>, vector<64x144xf32>, vector<8x144xf32> -> vector<8x144xf32>
    %c0_9 = arith.constant 0 : index
    %c0_10 = arith.constant 0 : index
    %10 = vector.load %arg5[%c0_9, %c0_10] : memref<1x144xf32, #tpu.memory_space<vmem>>, vector<1x144xf32>
    %11 = vector.broadcast %10 : vector<1x144xf32> to vector<8x144xf32>
    %12 = arith.addf %9, %11 : vector<8x144xf32>
    %c0_11 = arith.constant 0 : index
    %c0_12 = arith.constant 0 : index
    %13 = vector.load %arg6[%c0_11, %c0_12] : memref<8x144xf32, #tpu.memory_space<vmem>>, vector<8x144xf32>
    tpu.vector_store %arg6[%c0_11, %c0_12], %12 {strides = array<i32>} : memref<8x144xf32, #tpu.memory_space<vmem>>, vector<8x144xf32>,
    return
  }
  func.func @transform_0(%arg0: i32) -> (i32, i32) {
    %c0_i32 = arith.constant 0 : i32
    %c0_i32_0 = arith.constant 0 : i32
    return %arg0, %c0_i32 : i32, i32
  }
  func.func @transform_1(%arg0: i32) -> (i32, i32) {
    %c0_i32 = arith.constant 0 : i32
    %c0_i32_0 = arith.constant 0 : i32
    %c0_i32_1 = arith.constant 0 : i32
    return %c0_i32, %c0_i32_0 : i32, i32
  }
  func.func @transform_2(%arg0: i32) -> (i32, i32) {
    %c0_i32 = arith.constant 0 : i32
    %c0_i32_0 = arith.constant 0 : i32
    %c0_i32_1 = arith.constant 0 : i32
    return %c0_i32, %c0_i32_0 : i32, i32
  }
  func.func @transform_3(%arg0: i32) -> (i32, i32) {
    %c0_i32 = arith.constant 0 : i32
    %c0_i32_0 = arith.constant 0 : i32
    %c0_i32_1 = arith.constant 0 : i32
    return %c0_i32, %c0_i32_0 : i32, i32
  }
  func.func @transform_4(%arg0: i32) -> (i32, i32) {
    %c0_i32 = arith.constant 0 : i32
    %c0_i32_0 = arith.constant 0 : i32
    %c0_i32_1 = arith.constant 0 : i32
    return %c0_i32, %c0_i32_0 : i32, i32
  }
  func.func @transform_5(%arg0: i32) -> (i32, i32) {
    %c0_i32 = arith.constant 0 : i32
    %c0_i32_0 = arith.constant 0 : i32
    return %arg0, %c0_i32 : i32, i32
  }
}

</mosaic_0001>

<llo_original>
// kernel: tpu_custom_call.1
$region0: #{tpu_custom_call.1}
  #allocation0 [shape = 'u32[]', space=smem, size = 0x4, offset = 0x4, fixed_abs, tag = 'smem constant byte address 0x4 - core index']
  #allocation1 [shape = 'u32[72,128]{1,0:T(1,128)}', space=vmem, size = 0x9000, scoped, tag = 'internal scratch']
  %s0 = inlined_call_operand.hbm [shape: f32[8,32], index: 0, kind: input, shape index: {}]
  %s1 = inlined_call_operand.hbm [shape: f32[32,64], index: 1, kind: input, shape index: {}]
  %s2 = inlined_call_operand.vmem [shape: f32[1,64], index: 2, kind: input, shape index: {}]
  %s3 = inlined_call_operand.hbm [shape: f32[64,144], index: 3, kind: input, shape index: {}]
  %s4 = inlined_call_operand.vmem [shape: f32[1,144], index: 4, kind: input, shape index: {}]
  %s5 = inlined_call_operand.hbm [shape: f32[8,144], index: 5, kind: output, shape index: {}]
  %s6 = sld [smem:[#allocation0]]
  $region42: #{tpu_custom_call.1} parent=0
    _
  %s8 = ssub.s32 1, %s6
  %s9 = scalar_select 0, %s8, %s6
  $region1: #{tpu_custom_call.1} parent=0
    #allocation2 [shape = 'u8[4096]{0}', space=vmem, size = 0x1000, scoped, tag = 'input window, operand 0, single buffered']
    #allocation3 [shape = 's32[1]{0}', space=sflag, size = 0x4, scoped, tag = 'scoped memory for tpu_custom_call.1']
    #allocation4 [shape = 's32[1]{0}', space=sflag, size = 0x4, scoped, tag = 'scoped memory for tpu_custom_call.1']
    #allocation5 [shape = 'u8[16384]{0}', space=vmem, size = 0x4000, scoped, tag = 'input window, operand 1, single buffered']
    #allocation6 [shape = 's32[1]{0}', space=sflag, size = 0x4, scoped, tag = 'scoped memory for tpu_custom_call.1']
    #allocation7 [shape = 'u8[65536]{0}', space=vmem, size = 0x10000, scoped, tag = 'input window, operand 3, single buffered']
    #allocation8 [shape = 'u8[8192]{0}', space=vmem, size = 0x2000, scoped, tag = 'output window, operand 0, single buffered']
    %10 = vsyncpa [#allocation3], 0
    %11 = vsyncpa [#allocation6], 0
    %12 = vsyncpa [#allocation4], 0
    // Predicated region
    $region2: #{tpu_custom_call.1} parent=1 // pred_check
      _
    $region3: #{tpu_custom_call.1} parent=1 // pred_check_branch
      %14 = sbr.rel (0) target = $region5
    $region4: #{tpu_custom_call.1} parent=1 // pred_region
      %16 = vsyncadd [#allocation3], 0
      %s18 = sshll.u32 %s0, 4
      %s19 = int_to_ptr.hbm [resolvable:$true] %s18
      %s20 = sshll.u32 [#allocation2], 4
      %s21 = int_to_ptr.vmem [resolvable:$true] %s20
      %23 = dma.hbm_to_vmem [thread:$0]  %s19, 128, %s21, [#allocation3]
    $region5: #{tpu_custom_call.1} parent=1 // pred_fallthru
      _
    // Predicated region
    $region6: #{tpu_custom_call.1} parent=1 // pred_check
      _
    $region7: #{tpu_custom_call.1} parent=1 // pred_check_branch
      %25 = sbr.rel (0) target = $region9
    $region8: #{tpu_custom_call.1} parent=1 // pred_region
      %27 = vsyncadd [#allocation6], 0
      %s28 = sshll.u32 %s1, 4
      %s29 = int_to_ptr.hbm [resolvable:$true] %s28
      %s30 = sshll.u32 [#allocation5], 4
      %s31 = int_to_ptr.vmem [resolvable:$true] %s30
      %36 = dma.hbm_to_vmem [thread:$0]  %s29, 512, %s31, [#allocation6], 128, 128, 8
    $region9: #{tpu_custom_call.1} parent=1 // pred_fallthru
      _
    // Predicated region
    $region10: #{tpu_custom_call.1} parent=1 // pred_check
      _
    $region11: #{tpu_custom_call.1} parent=1 // pred_check_branch
      %38 = sbr.rel (0) target = $region13
    $region12: #{tpu_custom_call.1} parent=1 // pred_region
      _
    $region13: #{tpu_custom_call.1} parent=1 // pred_fallthru
      _
    // Predicated region
    $region14: #{tpu_custom_call.1} parent=1 // pred_check
      _
    $region15: #{tpu_custom_call.1} parent=1 // pred_check_branch
      %40 = sbr.rel (0) target = $region17
    $region16: #{tpu_custom_call.1} parent=1 // pred_region
      %42 = vsyncadd [#allocation6], 0
      %s43 = sshll.u32 %s3, 4
      %s44 = int_to_ptr.hbm [resolvable:$true] %s43
      %s45 = sshll.u32 [#allocation7], 4
      %s46 = int_to_ptr.vmem [resolvable:$true] %s45
      %51 = dma.hbm_to_vmem [thread:$0]  %s44, 2048, %s46, [#allocation6], 256, 256, 16
    $region17: #{tpu_custom_call.1} parent=1 // pred_fallthru
      _
    // Predicated region
    $region18: #{tpu_custom_call.1} parent=1 // pred_check
      _
    $region19: #{tpu_custom_call.1} parent=1 // pred_check_branch
      %53 = sbr.rel (0) target = $region21
    $region20: #{tpu_custom_call.1} parent=1 // pred_region
      _
    $region21: #{tpu_custom_call.1} parent=1 // pred_fallthru
      _
    // Predicated region
    $region22: #{tpu_custom_call.1} parent=1 // pred_check
      _
    $region23: #{tpu_custom_call.1} parent=1 // pred_check_branch
      %55 = sbr.rel (0) target = $region25
    $region24: #{tpu_custom_call.1} parent=1 // pred_region
      %57 = dma.done [#allocation3], 128
    $region25: #{tpu_custom_call.1} parent=1 // pred_fallthru
      _
    // Predicated region
    $region26: #{tpu_custom_call.1} parent=1 // pred_check
      _
    $region27: #{tpu_custom_call.1} parent=1 // pred_check_branch
      %59 = sbr.rel (0) target = $region29
    $region28: #{tpu_custom_call.1} parent=1 // pred_region
      %61 = dma.done [#allocation6], 512
    $region29: #{tpu_custom_call.1} parent=1 // pred_fallthru
      _
    // Predicated region
    $region30: #{tpu_custom_call.1} parent=1 // pred_check
      _
    $region31: #{tpu_custom_call.1} parent=1 // pred_check_branch
      %63 = sbr.rel (0) target = $region33
    $region32: #{tpu_custom_call.1} parent=1 // pred_region
      %65 = dma.done [#allocation6], 2048
    $region33: #{tpu_custom_call.1} parent=1 // pred_fallthru
      _
    %v66 = vld [vmem:[#allocation2] sm:$0xff]
    %v67 = vld [vmem:[#allocation5] sm:$0xff]
    %v68 = vld [vmem:[#allocation5 + $0x8] sm:$0xff]
    %v69 = vld [vmem:[#allocation5 + $0x10] sm:$0xff]
    %v70 = vld [vmem:[#allocation5 + $0x18] sm:$0xff]
    %v71 = vld [vmem:[%s2] sm:$0x1]
    %v73 = vperm.slane %v71, 0
    %vm75 = vcmask 261120
    %v77 = vsel %vm75, %v66, 0
    %79 = vmatpush.msra.mxu0 0.0
    %80 = vmatpush.msra.mxu0 0.0
    %81 = vmatpush.msra.mxu0 0.0
    %82 = vmatpush.msra.mxu0 0.0
    %83 = vmatpush.msra.mxu0 0.0
    %84 = vmatpush.msra.mxu0 0.0
    %85 = vmatpush.msra.mxu0 0.0
    %86 = vmatpush.msra.mxu0 0.0
    %87 = vmatpush.msra.mxu0 0.0
    %88 = vmatpush.msra.mxu0 0.0
    %89 = vmatpush.msra.mxu0 0.0
    %90 = vmatpush.msra.mxu0 0.0
    %91 = vmatpush.msra.mxu0 %v70
    %92 = vmatpush.msra.mxu0 %v69
    %93 = vmatpush.msra.mxu0 %v68
    %94 = vmatpush.msra.mxu0 %v67
    %95 = vmatmul.f32.gmra.mxu0 %v77
    %v96 = vpop.f32.mrf.mxu0
    %v97 = vadd.f32 %v73, %v96
    %98 = vdwg.mxu0
    %v99 = vmax.f32 %v97, 0.0
    %v100 = vld [vmem:[#allocation7] sm:$0xff]
    %v101 = vld [vmem:[#allocation7 + $0x8] sm:$0xff]
    %v102 = vld [vmem:[#allocation7 + $0x10] sm:$0xff]
    %v103 = vld [vmem:[#allocation7 + $0x18] sm:$0xff]
    %v104 = vld [vmem:[#allocation7 + $0x20] sm:$0xff]
    %v105 = vld [vmem:[#allocation7 + $0x28] sm:$0xff]
    %v106 = vld [vmem:[#allocation7 + $0x30] sm:$0xff]
    %v107 = vld [vmem:[#allocation7 + $0x38] sm:$0xff]
    %v108 = vld [vmem:[#allocation7 + $0x40] sm:$0xff]
    %v109 = vld [vmem:[#allocation7 + $0x48] sm:$0xff]
    %v110 = vld [vmem:[#allocation7 + $0x50] sm:$0xff]
    %v111 = vld [vmem:[#allocation7 + $0x58] sm:$0xff]
    %v112 = vld [vmem:[#allocation7 + $0x60] sm:$0xff]
    %v113 = vld [vmem:[#allocation7 + $0x68] sm:$0xff]
    %v114 = vld [vmem:[#allocation7 + $0x70] sm:$0xff]
    %v115 = vld [vmem:[#allocation7 + $0x78] sm:$0xff]
    %v116 = vld [vmem:[%s4] sm:$0x3]
    %v118 = vperm.slane %v116, 0
    %v119 = vperm.slane %v116, 1
    %vm122 = vcmask 523264
    %v124 = vsel %vm122, %v99, 0
    %126 = vmatpush.msra.mxu0 0.0
    %127 = vmatpush.msra.mxu0 0.0
    %128 = vmatpush.msra.mxu0 0.0
    %129 = vmatpush.msra.mxu0 0.0
    %130 = vmatpush.msra.mxu0 0.0
    %131 = vmatpush.msra.mxu0 0.0
    %132 = vmatpush.msra.mxu0 0.0
    %133 = vmatpush.msra.mxu0 0.0
    %134 = vmatpush.msra.mxu0 %v114
    %135 = vmatpush.msra.mxu0 %v112
    %136 = vmatpush.msra.mxu0 %v110
    %137 = vmatpush.msra.mxu0 %v108
    %138 = vmatpush.msra.mxu0 %v106
    %139 = vmatpush.msra.mxu0 %v104
    %140 = vmatpush.msra.mxu0 %v102
    %141 = vmatpush.msra.mxu0 %v100
    %142 = vmatmul.f32.gmra.mxu0 %v124
    %v143 = vpop.f32.mrf.mxu0
    %v144 = vadd.f32 %v118, %v143
    %145 = vdwg.mxu0
    %146 = vmatpush.msra.mxu0 0.0
    %147 = vmatpush.msra.mxu0 0.0
    %148 = vmatpush.msra.mxu0 0.0
    %149 = vmatpush.msra.mxu0 0.0
    %150 = vmatpush.msra.mxu0 0.0
    %151 = vmatpush.msra.mxu0 0.0
    %152 = vmatpush.msra.mxu0 0.0
    %153 = vmatpush.msra.mxu0 0.0
    %154 = vmatpush.msra.mxu0 %v115
    %155 = vmatpush.msra.mxu0 %v113
    %156 = vmatpush.msra.mxu0 %v111
    %157 = vmatpush.msra.mxu0 %v109
    %158 = vmatpush.msra.mxu0 %v107
    %159 = vmatpush.msra.mxu0 %v105
    %160 = vmatpush.msra.mxu0 %v103
    %161 = vmatpush.msra.mxu0 %v101
    %162 = vmatmul.f32.gmra.mxu0 %v124
    %v163 = vpop.f32.mrf.mxu0
    %v164 = vadd.f32 %v119, %v163
    %165 = vdwg.mxu0
    %166 = vst [vmem:[#allocation8] sm:$0xff] %v144
    %vm167 = vcmask 130048
    %168 = vst.msk [vmem:[#allocation8 + $0x8] sm:$0xff] %vm167, %v164
    // Predicated region
    $region34: #{tpu_custom_call.1} parent=1 // pred_check
      _
    $region35: #{tpu_custom_call.1} parent=1 // pred_check_branch
      %170 = sbr.rel (0) target = $region37
    $region36: #{tpu_custom_call.1} parent=1 // pred_region
      %172 = vsyncadd [#allocation4], 0
      %s174 = sshll.u32 [#allocation8], 4
      %s175 = int_to_ptr.vmem [resolvable:$true] %s174
      %s176 = sshll.u32 %s5, 4
      %s177 = int_to_ptr.hbm [resolvable:$true] %s176
      %179 = dma.vmem_to_hbm [thread:$0]  %s175, 256, %s177, [#allocation4]
    $region37: #{tpu_custom_call.1} parent=1 // pred_fallthru
      _
    // Predicated region
    $region38: #{tpu_custom_call.1} parent=1 // pred_check
      _
    $region39: #{tpu_custom_call.1} parent=1 // pred_check_branch
      %181 = sbr.rel (0) target = $region41
    $region40: #{tpu_custom_call.1} parent=1 // pred_region
      %183 = dma.done [#allocation4], 256
    $region41: #{tpu_custom_call.1} parent=1 // pred_fallthru
      _
    %184 = vsyncpa [#allocation3], 1
    %185 = vsyncpa [#allocation6], 1
    %186 = vsyncpa [#allocation4], 1

</llo_original>
